<compile_context>
chip_gen: v5e
topology: v5e:2x2
jax: 0.10.0
libtpu: 0.0.40
codegen_flags: <defaults>
</compile_context>

<pallas_src>
import functools

import jax
import jax.numpy as jnp
from jax.experimental import pallas as pl
from jax.experimental.pallas import tpu as pltpu


def _crop_kernel(shift_ref, x_ref, o_ref, slab_ref, *, blk, pad, h, w, c, n_total):
    """Per-sample replicate-pad (in VMEM) + integer crop.

    shift_ref: SMEM (2*N,) int32, flattened as (dx0, dy0, dx1, dy1, ...)
    x_ref    : VMEM (blk, C, H, W)      unpadded input samples
    o_ref    : VMEM (blk, C, H, W)      output
    slab_ref : VMEM (C, H+2p, W+2p)     scratch: one replicate-padded sample
    """
    hp = h + 2 * pad
    wp = w + 2 * pad
    base = pl.program_id(0) * blk

    @pl.loop(0, blk)
    def _(s):
        idx = base + s

        @pl.when(idx < n_total)          # ragged last block: skip tail samples
        def _():
            dx = shift_ref[2 * idx]      # column shift (grid[..., 0]) in [0, 2*pad]
            dy = shift_ref[2 * idx + 1]  # row shift    (grid[..., 1]) in [0, 2*pad]

            # ---- replicate-pad the sample into the VMEM slab (pad folded into
            # the kernel; the padded tensor never makes an HBM round trip). ----
            slab_ref[:, pad:pad + h, pad:pad + w] = x_ref[s]
            slab_ref[:, 0:pad, pad:pad + w] = jnp.broadcast_to(
                x_ref[s, :, 0:1, :], (c, pad, w))
            slab_ref[:, pad + h:hp, pad:pad + w] = jnp.broadcast_to(
                x_ref[s, :, h - 1:h, :], (c, pad, w))
            # Left/right columns (corners included): broadcast the first/last
            # valid column of the already row-padded slab across the pad lanes.
            slab_ref[:, :, 0:pad] = jnp.broadcast_to(
                slab_ref[:, :, pad:pad + 1], (c, hp, pad))
            slab_ref[:, :, pad + w:wp] = jnp.broadcast_to(
                slab_ref[:, :, pad + w - 1:pad + w], (c, hp, pad))

            # ---- crop: one dynamic sublane slice for the row shift; a small
            # static-lane-slice cascade for the column shift (one arm runs; a
            # static lane slice is a single XLU rotation).
            # TODO(synk): replace the column cascade with
            #   pltpu.roll(rows, shift=pad - dx, axis=-1) + static [:w]
            # once dynamic lane rotates at sub-128 widths are verified on all
            # target generations.
            for q in range(2 * pad + 1):
                @pl.when(dx == q)
                def _(q=q):
                    o_ref[s] = slab_ref[:, pl.ds(dy, h), q:q + w]


def _round_up(v, m):
    return -(-v // m) * m


def _vmem_capacity_bytes():
    """Physical VMEM per core; conservative fallback if the query fails."""
    cap = 64 * 1024 * 1024            # v7x physical -- safe lower bound everywhere
    try:
        info = pltpu.get_tpu_info()
        got = getattr(info, "vmem_capacity_bytes", None)
        if got:
            cap = int(got)
    except Exception:
        pass
    # sanity clamp (v5e/v6e = 128 MiB, v7x = 64 MiB)
    return min(max(cap, 32 * 1024 * 1024), 128 * 1024 * 1024)


def _pick_block(n, per_sample_bytes, block_budget):
    """Samples per grid step: fill the VMEM budget but keep enough grid steps
    for DMA double-buffering and v7x's 2-TensorCore sharding."""
    cap = max(1, int(block_budget) // (4 * per_sample_bytes))  # 2 bufs x (in+out)
    if n >= 8:
        cap = min(cap, max(1, n // 8))   # >= ~8 steps: pipeline steady state
    elif n >= 2:
        cap = min(cap, max(1, n // 2))   # >= 2 steps so both v7x TCs get work
    return max(1, min(cap, n))


def _crop_pallas(x, shift, *, pad):
    n, c, h, w = x.shape
    hp, wp = h + 2 * pad, w + 2 * pad
    itemsize = x.dtype.itemsize

    # (8,128)-tile-padded VMEM footprints (sub-32-bit dtypes pack denser along
    # sublanes, so this slightly over-estimates -> safe).
    per_sample = c * _round_up(h, 8) * _round_up(w, 128) * itemsize
    slab_bytes = c * _round_up(hp, 8) * _round_up(wp, 128) * itemsize

    vmem_cap = _vmem_capacity_bytes()
    vmem_limit = (vmem_cap * 3) // 4                 # headroom for Mosaic internals
    block_budget = max(4 * per_sample, vmem_limit - slab_bytes - (2 << 20))
    blk = _pick_block(n, per_sample, block_budget)
    est_use = 4 * blk * per_sample + slab_bytes + (2 << 20)
    vmem_limit = int(min(vmem_cap, max(vmem_limit, est_use)))

    grid = (pl.cdiv(n, blk),)
    kernel = functools.partial(
        _crop_kernel, blk=blk, pad=pad, h=h, w=w, c=c, n_total=n)

    cost = pl.CostEstimate(
        flops=0, transcendentals=0,
        bytes_accessed=int(2 * n * c * h * w * itemsize + shift.size * 4))

    return pl.pallas_call(
        kernel,
        out_shape=jax.ShapeDtypeStruct((n, c, h, w), x.dtype),
        grid_spec=pltpu.PrefetchScalarGridSpec(
            num_scalar_prefetch=1,
            grid=grid,
            in_specs=[pl.BlockSpec((blk, c, h, w), lambda i, sh: (i, 0, 0, 0))],
            out_specs=pl.BlockSpec((blk, c, h, w), lambda i, sh: (i, 0, 0, 0)),
            scratch_shapes=[pltpu.VMEM((c, hp, wp), x.dtype)],
        ),
        compiler_params=pltpu.CompilerParams(
            dimension_semantics=("parallel",),
            vmem_limit_bytes=vmem_limit,
        ),
        cost_estimate=cost,
    )(shift.reshape(-1), x)


@functools.partial(jax.jit, static_argnames=("pad", "aug"))
def random_shifts_aug(x, key, pad=4, aug=True):
    """JAX/Pallas port of RandomShiftsAug_old.forward.

    The sampled shift is an exact integer pixel offset, so grid_sample reduces
    to a replicate-pad + integer crop; both are fused in the Pallas kernel.
    """
    if not aug:
        return x
    n, _, h, w = x.shape
    assert h == w
    if pad == 0:
        return x  # shift is identically zero -> identity
    # torch.randint(0, 2*pad+1): dx = shift[:, 0] (columns), dy = shift[:, 1] (rows).
    shift = jax.random.randint(key, (n, 2), 0, 2 * pad + 1, dtype=jnp.int32)
    return _crop_pallas(x, shift, pad=pad)


def _reference(x, shifts, pad):
    n, c, h, w = x.shape
    xp = jnp.pad(x, ((0, 0), (0, 0), (pad, pad), (pad, pad)), mode="edge")
    return jnp.stack([
        jax.lax.dynamic_slice(xp[i], (0, int(shifts[i, 1]), int(shifts[i, 0])),
                              (c, h, w))
        for i in range(n)
    ])


if __name__ == "__main__":
    key = jax.random.PRNGKey(0)
    kx1, ks1, kx2, ks2 = jax.random.split(key, 4)
    pad = 4

    # Case 1: module-sized small input (one sample per grid step).
    x1 = jax.random.normal(kx1, (2, 4, 16, 16), dtype=jnp.float32)
    out1 = jax.block_until_ready(random_shifts_aug(x1, ks1, pad=pad, aug=True))
    assert out1.shape == x1.shape and out1.dtype == x1.dtype
    s1 = jax.random.randint(ks1, (x1.shape[0], 2), 0, 2 * pad + 1, dtype=jnp.int32)
    assert jnp.array_equal(out1, _reference(x1, s1, pad)), "mismatch (case 1)"

    # Case 2: multiple samples per grid step (exercises the blk > 1 loop path).
    x2 = jax.random.normal(kx2, (4, 3, 20, 20), dtype=jnp.float32)
    out2 = jax.block_until_ready(random_shifts_aug(x2, ks2, pad=pad, aug=True))
    assert out2.shape == x2.shape and out2.dtype == x2.dtype
    s2 = jax.random.randint(ks2, (x2.shape[0], 2), 0, 2 * pad + 1, dtype=jnp.int32)
    assert jnp.array_equal(out2, _reference(x2, s2, pad)), "mismatch (case 2)"

    print("KERNEL_OK")
</pallas_src>

<mosaic_0001>
module attributes {stable_mosaic.version = 11 : i64} {
  func.func @_crop_kernel(%arg0: i32, %arg1: memref<4xi32, #tpu.memory_space<smem>>, %arg2: memref<1x4x16x16xf32, #tpu.memory_space<vmem>>, %arg3: memref<1x4x16x16xf32, #tpu.memory_space<vmem>>, %arg4: memref<4x24x24xf32, #tpu.memory_space<vmem>>) attributes {dimension_semantics = [#tpu.dimension_semantics<parallel>], iteration_bounds = array<i64: 2>, scalar_prefetch = 1 : i64, scratch_operands = 1 : i64, tpu.core_type = #tpu.core_type<tc>, window_params = [{transform_indices = @transform_0, window_bounds = array<i64: 1, 4, 16, 16>}, {transform_indices = @transform_1, window_bounds = array<i64: 1, 4, 16, 16>}]} {
    %c1_i32 = arith.constant 1 : i32
    %0 = arith.muli %arg0, %c1_i32 : i32
    %c0_i32 = arith.constant 0 : i32
    %c1_i32_0 = arith.constant 1 : i32
    %1 = arith.muli %c0_i32, %c1_i32_0 : i32
    %c0_i32_1 = arith.constant 0 : i32
    %2 = arith.addi %c0_i32_1, %1 : i32
    %3 = arith.addi %0, %2 : i32
    %c2_i32 = arith.constant 2 : i32
    %4 = arith.cmpi slt, %3, %c2_i32 : i32
    %5 = arith.extui %4 : i1 to i32
    %c0_i32_2 = arith.constant 0 : i32
    %6 = arith.cmpi ne, %5, %c0_i32_2 : i32
    scf.if %6 {
      %c2_i32_4 = arith.constant 2 : i32
      %7 = arith.muli %c2_i32_4, %3 : i32
      %8 = arith.index_cast %7 : i32 to index
      %9 = memref.load %arg1[%8] : memref<4xi32, #tpu.memory_space<smem>>
      %c2_i32_5 = arith.constant 2 : i32
      %10 = arith.muli %c2_i32_5, %3 : i32
      %c1_i32_6 = arith.constant 1 : i32
      %11 = arith.addi %10, %c1_i32_6 : i32
      %12 = arith.index_cast %11 : i32 to index
      %13 = memref.load %arg1[%12] : memref<4xi32, #tpu.memory_space<smem>>
      %14 = arith.index_cast %2 : i32 to index
      %c0 = arith.constant 0 : index
      %c0_7 = arith.constant 0 : index
      %c0_8 = arith.constant 0 : index
      %15 = vector.load %arg2[%14, %c0, %c0_7, %c0_8] : memref<1x4x16x16xf32, #tpu.memory_space<vmem>>, vector<1x4x16x16xf32>
      %16 = vector.shape_cast %15 : vector<1x4x16x16xf32> to vector<4x16x16xf32>
      %c0_9 = arith.constant 0 : index
      %c4 = arith.constant 4 : index
      %c4_10 = arith.constant 4 : index
      %17 = vector.load %arg4[%c0_9, %c4, %c4_10] : memref<4x24x24xf32, #tpu.memory_space<vmem>>, vector<4x16x16xf32>
      tpu.vector_store %arg4[%c0_9, %c4, %c4_10], %16 {strides = array<i32>} : memref<4x24x24xf32, #tpu.memory_space<vmem>>, vector<4x16x16xf32>,
      %18 = arith.index_cast %2 : i32 to index
      %c0_11 = arith.constant 0 : index
      %c0_12 = arith.constant 0 : index
      %c0_13 = arith.constant 0 : index
      %19 = vector.load %arg2[%18, %c0_11, %c0_12, %c0_13] : memref<1x4x16x16xf32, #tpu.memory_space<vmem>>, vector<1x4x1x16xf32>
      %20 = vector.shape_cast %19 : vector<1x4x1x16xf32> to vector<4x1x16xf32>
      %21 = vector.shape_cast %20 : vector<4x1x16xf32> to vector<4x1x16xf32>
      %22 = vector.broadcast %21 : vector<4x1x16xf32> to vector<4x4x16xf32>
      %c0_14 = arith.constant 0 : index
      %c0_15 = arith.constant 0 : index
      %c4_16 = arith.constant 4 : index
      %23 = vector.load %arg4[%c0_14, %c0_15, %c4_16] : memref<4x24x24xf32, #tpu.memory_space<vmem>>, vector<4x4x16xf32>
      tpu.vector_store %arg4[%c0_14, %c0_15, %c4_16], %22 {strides = array<i32>} : memref<4x24x24xf32, #tpu.memory_space<vmem>>, vector<4x4x16xf32>,
      %24 = arith.index_cast %2 : i32 to index
      %c0_17 = arith.constant 0 : index
      %c15 = arith.constant 15 : index
      %c0_18 = arith.constant 0 : index
      %25 = vector.load %arg2[%24, %c0_17, %c15, %c0_18] : memref<1x4x16x16xf32, #tpu.memory_space<vmem>>, vector<1x4x1x16xf32>
      %26 = vector.shape_cast %25 : vector<1x4x1x16xf32> to vector<4x1x16xf32>
      %27 = vector.shape_cast %26 : vector<4x1x16xf32> to vector<4x1x16xf32>
      %28 = vector.broadcast %27 : vector<4x1x16xf32> to vector<4x4x16xf32>
      %c0_19 = arith.constant 0 : index
      %c20 = arith.constant 20 : index
      %c4_20 = arith.constant 4 : index
      %29 = vector.load %arg4[%c0_19, %c20, %c4_20] : memref<4x24x24xf32, #tpu.memory_space<vmem>>, vector<4x4x16xf32>
      tpu.vector_store %arg4[%c0_19, %c20, %c4_20], %28 {strides = array<i32>} : memref<4x24x24xf32, #tpu.memory_space<vmem>>, vector<4x4x16xf32>,
      %c0_21 = arith.constant 0 : index
      %c0_22 = arith.constant 0 : index
      %c4_23 = arith.constant 4 : index
      %30 = vector.load %arg4[%c0_21, %c0_22, %c4_23] : memref<4x24x24xf32, #tpu.memory_space<vmem>>, vector<4x24x1xf32>
      %31 = vector.shape_cast %30 : vector<4x24x1xf32> to vector<4x24x1xf32>
      %32 = vector.broadcast %31 : vector<4x24x1xf32> to vector<4x24x4xf32>
      %c0_24 = arith.constant 0 : index
      %c0_25 = arith.constant 0 : index
      %c0_26 = arith.constant 0 : index
      %33 = vector.load %arg4[%c0_24, %c0_25, %c0_26] : memref<4x24x24xf32, #tpu.memory_space<vmem>>, vector<4x24x4xf32>
      tpu.vector_store %arg4[%c0_24, %c0_25, %c0_26], %32 {strides = array<i32>} : memref<4x24x24xf32, #tpu.memory_space<vmem>>, vector<4x24x4xf32>,
      %c0_27 = arith.constant 0 : index
      %c0_28 = arith.constant 0 : index
      %c19 = arith.constant 19 : index
      %34 = vector.load %arg4[%c0_27, %c0_28, %c19] : memref<4x24x24xf32, #tpu.memory_space<vmem>>, vector<4x24x1xf32>
      %35 = vector.shape_cast %34 : vector<4x24x1xf32> to vector<4x24x1xf32>
      %36 = vector.broadcast %35 : vector<4x24x1xf32> to vector<4x24x4xf32>
      %c0_29 = arith.constant 0 : index
      %c0_30 = arith.constant 0 : index
      %c20_31 = arith.constant 20 : index
      %37 = vector.load %arg4[%c0_29, %c0_30, %c20_31] : memref<4x24x24xf32, #tpu.memory_space<vmem>>, vector<4x24x4xf32>
      tpu.vector_store %arg4[%c0_29, %c0_30, %c20_31], %36 {strides = array<i32>} : memref<4x24x24xf32, #tpu.memory_space<vmem>>, vector<4x24x4xf32>,
      %c0_i32_32 = arith.constant 0 : i32
      %38 = arith.cmpi eq, %9, %c0_i32_32 : i32
      %39 = arith.extui %38 : i1 to i32
      %c0_i32_33 = arith.constant 0 : i32
      %40 = arith.cmpi ne, %39, %c0_i32_33 : i32
      scf.if %40 {
        %c0_44 = arith.constant 0 : index
        %65 = arith.index_cast %13 : i32 to index
        %c0_45 = arith.constant 0 : index
        %66 = vector.load %arg4[%c0_44, %65, %c0_45] : memref<4x24x24xf32, #tpu.memory_space<vmem>>, vector<4x16x16xf32>
        %67 = arith.index_cast %2 : i32 to index
        %c0_46 = arith.constant 0 : index
        %c0_47 = arith.constant 0 : index
        %c0_48 = arith.constant 0 : index
        %68 = vector.load %arg3[%67, %c0_46, %c0_47, %c0_48] : memref<1x4x16x16xf32, #tpu.memory_space<vmem>>, vector<1x4x16x16xf32>
        %69 = vector.shape_cast %68 : vector<1x4x16x16xf32> to vector<4x16x16xf32>
        %70 = vector.shape_cast %66 : vector<4x16x16xf32> to vector<1x4x16x16xf32>
        tpu.vector_store %arg3[%67, %c0_46, %c0_47, %c0_48], %70 {strides = array<i32>} : memref<1x4x16x16xf32, #tpu.memory_space<vmem>>, vector<1x4x16x16xf32>,
      } else {
      }
      %c1_i32_34 = arith.constant 1 : i32
      %41 = arith.cmpi eq, %9, %c1_i32_34 : i32
      %42 = arith.extui %41 : i1 to i32
      %c0_i32_35 = arith.constant 0 : i32
      %43 = arith.cmpi ne, %42, %c0_i32_35 : i32
      scf.if %43 {
        %c0_44 = arith.constant 0 : index
        %65 = arith.index_cast %13 : i32 to index
        %c1 = arith.constant 1 : index
        %66 = vector.load %arg4[%c0_44, %65, %c1] : memref<4x24x24xf32, #tpu.memory_space<vmem>>, vector<4x16x16xf32>
        %67 = arith.index_cast %2 : i32 to index
        %c0_45 = arith.constant 0 : index
        %c0_46 = arith.constant 0 : index
        %c0_47 = arith.constant 0 : index
        %68 = vector.load %arg3[%67, %c0_45, %c0_46, %c0_47] : memref<1x4x16x16xf32, #tpu.memory_space<vmem>>, vector<1x4x16x16xf32>
        %69 = vector.shape_cast %68 : vector<1x4x16x16xf32> to vector<4x16x16xf32>
        %70 = vector.shape_cast %66 : vector<4x16x16xf32> to vector<1x4x16x16xf32>
        tpu.vector_store %arg3[%67, %c0_45, %c0_46, %c0_47], %70 {strides = array<i32>} : memref<1x4x16x16xf32, #tpu.memory_space<vmem>>, vector<1x4x16x16xf32>,
      } else {
      }
      %c2_i32_36 = arith.constant 2 : i32
      %44 = arith.cmpi eq, %9, %c2_i32_36 : i32
      %45 = arith.extui %44 : i1 to i32
      %c0_i32_37 = arith.constant 0 : i32
      %46 = arith.cmpi ne, %45, %c0_i32_37 : i32
      scf.if %46 {
        %c0_44 = arith.constant 0 : index
        %65 = arith.index_cast %13 : i32 to index
        %c2 = arith.constant 2 : index
        %66 = vector.load %arg4[%c0_44, %65, %c2] : memref<4x24x24xf32, #tpu.memory_space<vmem>>, vector<4x16x16xf32>
        %67 = arith.index_cast %2 : i32 to index
        %c0_45 = arith.constant 0 : index
        %c0_46 = arith.constant 0 : index
        %c0_47 = arith.constant 0 : index
        %68 = vector.load %arg3[%67, %c0_45, %c0_46, %c0_47] : memref<1x4x16x16xf32, #tpu.memory_space<vmem>>, vector<1x4x16x16xf32>
        %69 = vector.shape_cast %68 : vector<1x4x16x16xf32> to vector<4x16x16xf32>
        %70 = vector.shape_cast %66 : vector<4x16x16xf32> to vector<1x4x16x16xf32>
        tpu.vector_store %arg3[%67, %c0_45, %c0_46, %c0_47], %70 {strides = array<i32>} : memref<1x4x16x16xf32, #tpu.memory_space<vmem>>, vector<1x4x16x16xf32>,
      } else {
      }
      %c3_i32 = arith.constant 3 : i32
      %47 = arith.cmpi eq, %9, %c3_i32 : i32
      %48 = arith.extui %47 : i1 to i32
      %c0_i32_38 = arith.constant 0 : i32
      %49 = arith.cmpi ne, %48, %c0_i32_38 : i32
      scf.if %49 {
        %c0_44 = arith.constant 0 : index
        %65 = arith.index_cast %13 : i32 to index
        %c3 = arith.constant 3 : index
        %66 = vector.load %arg4[%c0_44, %65, %c3] : memref<4x24x24xf32, #tpu.memory_space<vmem>>, vector<4x16x16xf32>
        %67 = arith.index_cast %2 : i32 to index
        %c0_45 = arith.constant 0 : index
        %c0_46 = arith.constant 0 : index
        %c0_47 = arith.constant 0 : index
        %68 = vector.load %arg3[%67, %c0_45, %c0_46, %c0_47] : memref<1x4x16x16xf32, #tpu.memory_space<vmem>>, vector<1x4x16x16xf32>
        %69 = vector.shape_cast %68 : vector<1x4x16x16xf32> to vector<4x16x16xf32>
        %70 = vector.shape_cast %66 : vector<4x16x16xf32> to vector<1x4x16x16xf32>
        tpu.vector_store %arg3[%67, %c0_45, %c0_46, %c0_47], %70 {strides = array<i32>} : memref<1x4x16x16xf32, #tpu.memory_space<vmem>>, vector<1x4x16x16xf32>,
      } else {
      }
      %c4_i32 = arith.constant 4 : i32
      %50 = arith.cmpi eq, %9, %c4_i32 : i32
      %51 = arith.extui %50 : i1 to i32
      %c0_i32_39 = arith.constant 0 : i32
      %52 = arith.cmpi ne, %51, %c0_i32_39 : i32
      scf.if %52 {
        %c0_44 = arith.constant 0 : index
        %65 = arith.index_cast %13 : i32 to index
        %c4_45 = arith.constant 4 : index
        %66 = vector.load %arg4[%c0_44, %65, %c4_45] : memref<4x24x24xf32, #tpu.memory_space<vmem>>, vector<4x16x16xf32>
        %67 = arith.index_cast %2 : i32 to index
        %c0_46 = arith.constant 0 : index
        %c0_47 = arith.constant 0 : index
        %c0_48 = arith.constant 0 : index
        %68 = vector.load %arg3[%67, %c0_46, %c0_47, %c0_48] : memref<1x4x16x16xf32, #tpu.memory_space<vmem>>, vector<1x4x16x16xf32>
        %69 = vector.shape_cast %68 : vector<1x4x16x16xf32> to vector<4x16x16xf32>
        %70 = vector.shape_cast %66 : vector<4x16x16xf32> to vector<1x4x16x16xf32>
        tpu.vector_store %arg3[%67, %c0_46, %c0_47, %c0_48], %70 {strides = array<i32>} : memref<1x4x16x16xf32, #tpu.memory_space<vmem>>, vector<1x4x16x16xf32>,
      } else {
      }
      %c5_i32 = arith.constant 5 : i32
      %53 = arith.cmpi eq, %9, %c5_i32 : i32
      %54 = arith.extui %53 : i1 to i32
      %c0_i32_40 = arith.constant 0 : i32
      %55 = arith.cmpi ne, %54, %c0_i32_40 : i32
      scf.if %55 {
        %c0_44 = arith.constant 0 : index
        %65 = arith.index_cast %13 : i32 to index
        %c5 = arith.constant 5 : index
        %66 = vector.load %arg4[%c0_44, %65, %c5] : memref<4x24x24xf32, #tpu.memory_space<vmem>>, vector<4x16x16xf32>
        %67 = arith.index_cast %2 : i32 to index
        %c0_45 = arith.constant 0 : index
        %c0_46 = arith.constant 0 : index
        %c0_47 = arith.constant 0 : index
        %68 = vector.load %arg3[%67, %c0_45, %c0_46, %c0_47] : memref<1x4x16x16xf32, #tpu.memory_space<vmem>>, vector<1x4x16x16xf32>
        %69 = vector.shape_cast %68 : vector<1x4x16x16xf32> to vector<4x16x16xf32>
        %70 = vector.shape_cast %66 : vector<4x16x16xf32> to vector<1x4x16x16xf32>
        tpu.vector_store %arg3[%67, %c0_45, %c0_46, %c0_47], %70 {strides = array<i32>} : memref<1x4x16x16xf32, #tpu.memory_space<vmem>>, vector<1x4x16x16xf32>,
      } else {
      }
      %c6_i32 = arith.constant 6 : i32
      %56 = arith.cmpi eq, %9, %c6_i32 : i32
      %57 = arith.extui %56 : i1 to i32
      %c0_i32_41 = arith.constant 0 : i32
      %58 = arith.cmpi ne, %57, %c0_i32_41 : i32
      scf.if %58 {
        %c0_44 = arith.constant 0 : index
        %65 = arith.index_cast %13 : i32 to index
        %c6 = arith.constant 6 : index
        %66 = vector.load %arg4[%c0_44, %65, %c6] : memref<4x24x24xf32, #tpu.memory_space<vmem>>, vector<4x16x16xf32>
        %67 = arith.index_cast %2 : i32 to index
        %c0_45 = arith.constant 0 : index
        %c0_46 = arith.constant 0 : index
        %c0_47 = arith.constant 0 : index
        %68 = vector.load %arg3[%67, %c0_45, %c0_46, %c0_47] : memref<1x4x16x16xf32, #tpu.memory_space<vmem>>, vector<1x4x16x16xf32>
        %69 = vector.shape_cast %68 : vector<1x4x16x16xf32> to vector<4x16x16xf32>
        %70 = vector.shape_cast %66 : vector<4x16x16xf32> to vector<1x4x16x16xf32>
        tpu.vector_store %arg3[%67, %c0_45, %c0_46, %c0_47], %70 {strides = array<i32>} : memref<1x4x16x16xf32, #tpu.memory_space<vmem>>, vector<1x4x16x16xf32>,
      } else {
      }
      %c7_i32 = arith.constant 7 : i32
      %59 = arith.cmpi eq, %9, %c7_i32 : i32
      %60 = arith.extui %59 : i1 to i32
      %c0_i32_42 = arith.constant 0 : i32
      %61 = arith.cmpi ne, %60, %c0_i32_42 : i32
      scf.if %61 {
        %c0_44 = arith.constant 0 : index
        %65 = arith.index_cast %13 : i32 to index
        %c7 = arith.constant 7 : index
        %66 = vector.load %arg4[%c0_44, %65, %c7] : memref<4x24x24xf32, #tpu.memory_space<vmem>>, vector<4x16x16xf32>
        %67 = arith.index_cast %2 : i32 to index
        %c0_45 = arith.constant 0 : index
        %c0_46 = arith.constant 0 : index
        %c0_47 = arith.constant 0 : index
        %68 = vector.load %arg3[%67, %c0_45, %c0_46, %c0_47] : memref<1x4x16x16xf32, #tpu.memory_space<vmem>>, vector<1x4x16x16xf32>
        %69 = vector.shape_cast %68 : vector<1x4x16x16xf32> to vector<4x16x16xf32>
        %70 = vector.shape_cast %66 : vector<4x16x16xf32> to vector<1x4x16x16xf32>
        tpu.vector_store %arg3[%67, %c0_45, %c0_46, %c0_47], %70 {strides = array<i32>} : memref<1x4x16x16xf32, #tpu.memory_space<vmem>>, vector<1x4x16x16xf32>,
      } else {
      }
      %c8_i32 = arith.constant 8 : i32
      %62 = arith.cmpi eq, %9, %c8_i32 : i32
      %63 = arith.extui %62 : i1 to i32
      %c0_i32_43 = arith.constant 0 : i32
      %64 = arith.cmpi ne, %63, %c0_i32_43 : i32
      scf.if %64 {
        %c0_44 = arith.constant 0 : index
        %65 = arith.index_cast %13 : i32 to index
        %c8 = arith.constant 8 : index
        %66 = vector.load %arg4[%c0_44, %65, %c8] : memref<4x24x24xf32, #tpu.memory_space<vmem>>, vector<4x16x16xf32>
        %67 = arith.index_cast %2 : i32 to index
        %c0_45 = arith.constant 0 : index
        %c0_46 = arith.constant 0 : index
        %c0_47 = arith.constant 0 : index
        %68 = vector.load %arg3[%67, %c0_45, %c0_46, %c0_47] : memref<1x4x16x16xf32, #tpu.memory_space<vmem>>, vector<1x4x16x16xf32>
        %69 = vector.shape_cast %68 : vector<1x4x16x16xf32> to vector<4x16x16xf32>
        %70 = vector.shape_cast %66 : vector<4x16x16xf32> to vector<1x4x16x16xf32>
        tpu.vector_store %arg3[%67, %c0_45, %c0_46, %c0_47], %70 {strides = array<i32>} : memref<1x4x16x16xf32, #tpu.memory_space<vmem>>, vector<1x4x16x16xf32>,
      } else {
      }
    } else {
    }
    %c1_i32_3 = arith.constant 1 : i32
    return
  }
  func.func @transform_0(%arg0: i32, %arg1: memref<4xi32, #tpu.memory_space<smem>>) -> (i32, i32, i32, i32) {
    %c0_i32 = arith.constant 0 : i32
    %c0_i32_0 = arith.constant 0 : i32
    %c0_i32_1 = arith.constant 0 : i32
    %c0_i32_2 = arith.constant 0 : i32
    return %arg0, %c0_i32, %c0_i32_0, %c0_i32_1 : i32, i32, i32, i32
  }
  func.func @transform_1(%arg0: i32, %arg1: memref<4xi32, #tpu.memory_space<smem>>) -> (i32, i32, i32, i32) {
    %c0_i32 = arith.constant 0 : i32
    %c0_i32_0 = arith.constant 0 : i32
    %c0_i32_1 = arith.constant 0 : i32
    %c0_i32_2 = arith.constant 0 : i32
    return %arg0, %c0_i32, %c0_i32_0, %c0_i32_1 : i32, i32, i32, i32
  }
}

</mosaic_0001>

<llo_original>
// kernel: random_shifts_aug.1
$region0: #{random_shifts_aug.1}
  #allocation0 [shape = 'u32[]', space=smem, size = 0x4, offset = 0x4, fixed_abs, tag = 'smem constant byte address 0x4 - core index']
  #allocation1 [shape = 'u32[72,128]{1,0:T(1,128)}', space=vmem, size = 0x9000, scoped, tag = 'internal scratch']
  #allocation2 [shape = 'f32[4,24,24]{2,1,0:T(8,128)}', space=vmem, size = 0xc000, scoped, tag = 'scratch operand']
  #allocation3 [shape = 's32[1]{0}', space=sflag, size = 0x4, scoped, tag = 'scoped memory for random_shifts_aug.1']
  #allocation4 [shape = 'u8[512]{0}', space=smem, size = 0x200, scoped, tag = 'prefetched SMEM operand 0']
  %s0 = inlined_call_operand.vmem [shape: s32[4], index: 0, kind: input, shape index: {}]
  %s1 = inlined_call_operand.hbm [shape: f32[2,4,16,16], index: 1, kind: input, shape index: {}]
  %s2 = inlined_call_operand.hbm [shape: f32[2,4,16,16], index: 2, kind: output, shape index: {}]
  %s3 = sld [smem:[#allocation0]]
  $region81: #{random_shifts_aug.1} parent=0
    _
  %s5 = ssub.s32 1, %s3
  %s6 = scalar_select 0, %s5, %s3
  %s8 = sshll.u32 %s0, 4
  %s9 = int_to_ptr.vmem [resolvable:$true] %s8
  %11 = dma.vmem_to_smem %s9, 16, [#allocation4], [#allocation3]
  %13 = dma.done [#allocation3], 16
  %14 = sfence
  $region1: #{random_shifts_aug.1} parent=0
    #allocation5 [shape = 'u8[65536]{0}', space=vmem, size = 0x10000, scoped, tag = 'input window, operand 1']
    #allocation6 [shape = 's32[2]{0}', space=sflag, size = 0x8, scoped, tag = 'scoped memory for random_shifts_aug.1']
    #allocation7 [shape = 's32[2]{0}', space=sflag, size = 0x8, scoped, tag = 'scoped memory for random_shifts_aug.1']
    #allocation8 [shape = 'u8[65536]{0}', space=vmem, size = 0x10000, scoped, tag = 'output window, operand 0']
    %15 = vsyncpa [#allocation6], 0
    %s16 = scalar_lea.sflag [#allocation6], 1
    %17 = vsyncpa %s16, 0
    %18 = vsyncpa [#allocation7], 0
    %s19 = scalar_lea.sflag [#allocation7], 1
    %20 = vsyncpa %s19, 0
    loop: start=0, step=1, limit=4
    $region2: #{random_shifts_aug.1} parent=1 // loop_pre_header
      _
    $region3: #{random_shifts_aug.1} parent=1 // loop_header
      %s22 = sphi 0, %s26
      %p23 = scmp.ge.s32.totalorder %s22, 4
      %s32 = sphi 0, %s34
      %s35 = sphi 0, %s32
      %s36 = sphi 0, %s35
      %s52 = sphi 0, %s36
      %s58 = sphi 0, %s60
      %s61 = sphi 0, %s58
      %s62 = sphi 0, %s61
      %s78 = sphi 0, %s62
    $region4: #{random_shifts_aug.1} parent=1 // loop_header_branch
      %25 = sbr.rel (%p23) target = $region8
    $region5: #{random_shifts_aug.1} parent=1 // loop_body
      %s27 = ssub.s32 %s22, 1
      %s28 = ssub.s32 %s22, 2
      %s29 = sadd.s32 %s22, 1
      %s30 = ssub.s32 %s22, %s29
      %p31 = scmp.eq.s32.totalorder %s30, 0
      %s33 = sadd.s32 %s32, 1
      %s34 = scalar_select %p31, %s32, %s33
      %p37 = pneg %p31
      %p38 = scmp.eq.s32.totalorder %s22, 1
      %p39 = por %p37, %p38
      %p40 = scmp.ne.s32.totalorder %s32, %s35
      %p41 = scmp.eq.s32.totalorder %s22, 0
      %p42 = por %p40, %p41
      %p43 = scmp.ne.s32.totalorder %s32, %s35
      %p44 = scmp.eq.s32.totalorder %s27, 1
      %p45 = por %p43, %p44
      %p46 = scmp.ne.s32.totalorder %s35, %s36
      %p47 = scmp.eq.s32.totalorder %s27, 0
      %p48 = por %p46, %p47
      %p49 = scmp.ne.s32.totalorder %s35, %s36
      %p50 = scmp.eq.s32.totalorder %s28, 1
      %p51 = por %p49, %p50
      %p53 = scmp.ne.s32.totalorder %s36, %s52
      %p54 = scmp.eq.s32.totalorder %s28, 0
      %p55 = por %p53, %p54
      %s56 = ssub.s32 %s22, %s29
      %p57 = scmp.eq.s32.totalorder %s56, 0
      %s59 = sadd.s32 %s58, 1
      %s60 = scalar_select %p57, %s58, %s59
      %p63 = pneg %p57
      %p64 = scmp.eq.s32.totalorder %s22, 1
      %p65 = por %p63, %p64
      %p66 = scmp.ne.s32.totalorder %s58, %s61
      %p67 = scmp.eq.s32.totalorder %s22, 0
      %p68 = por %p66, %p67
      %p69 = scmp.ne.s32.totalorder %s58, %s61
      %p70 = scmp.eq.s32.totalorder %s27, 1
      %p71 = por %p69, %p70
      %p72 = scmp.ne.s32.totalorder %s61, %s62
      %p73 = scmp.eq.s32.totalorder %s27, 0
      %p74 = por %p72, %p73
      %p75 = scmp.ne.s32.totalorder %s61, %s62
      %p76 = scmp.eq.s32.totalorder %s28, 1
      %p77 = por %p75, %p76
      %p79 = scmp.ne.s32.totalorder %s62, %s78
      %p80 = scmp.eq.s32.totalorder %s28, 0
      %p81 = por %p79, %p80
      %p82 = scmp.le.s32.totalorder 1, %s22
      %p83 = scmp.lt.s32.totalorder %s22, 3
      %p84 = pnand %p82, %p83
      %p85 = pneg %p84
      // Predicated region
      $region9: #{random_shifts_aug.1} parent=5 // pred_check
        _
      $region10: #{random_shifts_aug.1} parent=5 // pred_check_branch
        %87 = sbr.rel (%p84) target = $region12
      $region11: #{random_shifts_aug.1} parent=5 // pred_region
        %s88 = ssub.s32 %s22, 1
      $region12: #{random_shifts_aug.1} parent=5 // pred_fallthru
        _
      %p89 = scmp.lt.s32.totalorder %s22, 2
      // Predicated region
      $region13: #{random_shifts_aug.1} parent=5 // pred_check
        %p90 = pneg %p89
      $region14: #{random_shifts_aug.1} parent=5 // pred_check_branch
        %92 = sbr.rel (%p90) target = $region16
      $region15: #{random_shifts_aug.1} parent=5 // pred_region
        // Predicated region
        $region17: #{random_shifts_aug.1} parent=15 // pred_check
          %p93 = pneg %p42
        $region18: #{random_shifts_aug.1} parent=15 // pred_check_branch
          %95 = sbr.rel (%p93) target = $region20
        $region19: #{random_shifts_aug.1} parent=15 // pred_region
          %s96 = sand.u32 %s32, 1
          %s97 = scalar_lea.sflag [#allocation6], %s96
          %s98 = sand.u32 %s32, 1
          %s99 = smul.addr %s98, 64
          %s100 = scalar_lea.vmem [#allocation5], %s99
          %102 = vsyncadd %s97, 0
          %s103 = smul.addr %s22, 8
          %s104 = smul.addr %s103, 8
          %s105 = scalar_lea.hbm %s1, %s104
          %s106 = sshll.u32 %s105, 4
          %s107 = int_to_ptr.hbm [resolvable:$true] %s106
          %s108 = sshll.u32 %s100, 4
          %s109 = int_to_ptr.vmem [resolvable:$true] %s108
          %114 = dma.hbm_to_vmem [thread:$0]  %s107, 1024, %s109, %s97, 128, 128, 8
        $region20: #{random_shifts_aug.1} parent=15 // pred_fallthru
          _
      $region16: #{random_shifts_aug.1} parent=5 // pred_fallthru
        _
      %p115 = scmp.le.s32.totalorder 1, %s22
      %p116 = scmp.lt.s32.totalorder %s22, 3
      %p117 = pnand %p115, %p116
      %p118 = pneg %p117
      // Predicated region
      $region21: #{random_shifts_aug.1} parent=5 // pred_check
        _
      $region22: #{random_shifts_aug.1} parent=5 // pred_check_branch
        %120 = sbr.rel (%p117) target = $region24
      $region23: #{random_shifts_aug.1} parent=5 // pred_region
        %s121 = ssub.s32 %s22, 1
        %s122 = sand.u32 %s35, 1
        %s123 = scalar_lea.sflag [#allocation6], %s122
        %s124 = sand.u32 %s35, 1
        %s125 = smul.addr %s124, 64
        %s126 = scalar_lea.vmem [#allocation5], %s125
        // Predicated region
        $region25: #{random_shifts_aug.1} parent=23 // pred_check
          %p127 = pneg %p48
        $region26: #{random_shifts_aug.1} parent=23 // pred_check_branch
          %129 = sbr.rel (%p127) target = $region28
        $region27: #{random_shifts_aug.1} parent=23 // pred_region
          %131 = dma.done %s123, 1024
        $region28: #{random_shifts_aug.1} parent=23 // pred_fallthru
          _
        %s132 = sand.u32 %s35, 1
        %s133 = scalar_lea.sflag [#allocation6], %s132
        %s134 = sand.u32 %s35, 1
        %s135 = smul.addr %s134, 64
        %s136 = scalar_lea.vmem [#allocation5], %s135
        %p137 = pneg %p48
        %p138 = pneg %p45
        %p139 = pneg %p74
        %p140 = pneg %p71
        %s141 = sand.u32 %s61, 1
        %s142 = scalar_lea.sflag [#allocation7], %s141
        %s143 = sand.u32 %s61, 1
        %s144 = smul.addr %s143, 64
        %s145 = scalar_lea.vmem [#allocation8], %s144
        %p146 = scmp.lt.s32.totalorder %s27, 2
        // Predicated region
        $region29: #{random_shifts_aug.1} parent=23 // pred_check
          %p147 = pneg %p146
        $region30: #{random_shifts_aug.1} parent=23 // pred_check_branch
          %149 = sbr.rel (%p147) target = $region32
        $region31: #{random_shifts_aug.1} parent=23 // pred_region
          %s150 = smul.u32 %s27, 2
          %s151 = sld [smem:[#allocation4 + %s150]]
          %s152 = sadd.s32 %s150, 1
          %s153 = sld [smem:[#allocation4 + %s152]]
          %v154 = vld [vmem:[%s126] sm:$0xff]
          %v155 = vld [vmem:[%s126 + $0x8] sm:$0xff]
          %v156 = vld [vmem:[%s126 + $0x10] sm:$0xff]
          %v157 = vld [vmem:[%s126 + $0x18] sm:$0xff]
          %v158 = vld [vmem:[%s126 + $0x20] sm:$0xff]
          %v159 = vld [vmem:[%s126 + $0x28] sm:$0xff]
          %v160 = vld [vmem:[%s126 + $0x30] sm:$0xff]
          %v161 = vld [vmem:[%s126 + $0x38] sm:$0xff]
          %170 = vrot.lane.b32.xlu0 %v154, 4
          %v171 = vpop.permute.xlu0 %170
          %172 = vrot.lane.b32.xlu0 %v155, 4
          %v173 = vpop.permute.xlu0 %172
          %174 = vrot.lane.b32.xlu0 %v156, 4
          %v175 = vpop.permute.xlu0 %174
          %176 = vrot.lane.b32.xlu0 %v157, 4
          %v177 = vpop.permute.xlu0 %176
          %178 = vrot.lane.b32.xlu0 %v158, 4
          %v179 = vpop.permute.xlu0 %178
          %180 = vrot.lane.b32.xlu0 %v159, 4
          %v181 = vpop.permute.xlu0 %180
          %182 = vrot.lane.b32.xlu0 %v160, 4
          %v183 = vpop.permute.xlu0 %182
          %184 = vrot.lane.b32.xlu0 %v161, 4
          %v185 = vpop.permute.xlu0 %184
          %vm194 = vcmask 162848
          %195 = vst.msk [vmem:[#allocation2 + $0x4] sm:$0xff] %vm194, %v171
          %196 = vst.msk [vmem:[#allocation2 + $0xc] sm:$0xff] %vm194, %v173
          %197 = vst.msk [vmem:[#allocation2 + $0x1c] sm:$0xff] %vm194, %v175
          %198 = vst.msk [vmem:[#allocation2 + $0x24] sm:$0xff] %vm194, %v177
          %199 = vst.msk [vmem:[#allocation2 + $0x34] sm:$0xff] %vm194, %v179
          %200 = vst.msk [vmem:[#allocation2 + $0x3c] sm:$0xff] %vm194, %v181
          %201 = vst.msk [vmem:[#allocation2 + $0x4c] sm:$0xff] %vm194, %v183
          %202 = vst.msk [vmem:[#allocation2 + $0x54] sm:$0xff] %vm194, %v185
          %v203 = vld [vmem:[%s126] sm:$0x1]
          %v204 = vld [vmem:[%s126 + $0x10] sm:$0x1]
          %v205 = vld [vmem:[%s126 + $0x20] sm:$0x1]
          %v206 = vld [vmem:[%s126 + $0x30] sm:$0x1]
          %v207 = vperm.slane %v203, 0
          %v208 = vperm.slane %v204, 0
          %v209 = vperm.slane %v205, 0
          %v210 = vperm.slane %v206, 0
          %215 = vrot.lane.b32.xlu0 %v207, 4
          %v216 = vpop.permute.xlu0 %215
          %217 = vrot.lane.b32.xlu0 %v208, 4
          %v218 = vpop.permute.xlu0 %217
          %219 = vrot.lane.b32.xlu0 %v209, 4
          %v220 = vpop.permute.xlu0 %219
          %221 = vrot.lane.b32.xlu0 %v210, 4
          %v222 = vpop.permute.xlu0 %221
          %vm227 = vcmask 158752
          %228 = vst.msk [vmem:[#allocation2] sm:$0xf] %vm227, %v216
          %229 = vst.msk [vmem:[#allocation2 + $0x18] sm:$0xf] %vm227, %v218
          %230 = vst.msk [vmem:[#allocation2 + $0x30] sm:$0xf] %vm227, %v220
          %231 = vst.msk [vmem:[#allocation2 + $0x48] sm:$0xf] %vm227, %v222
          %v232 = vld [vmem:[%s126 + $0xf] sm:$0x1]
          %v233 = vld [vmem:[%s126 + $0x1f] sm:$0x1]
          %v234 = vld [vmem:[%s126 + $0x2f] sm:$0x1]
          %v235 = vld [vmem:[%s126 + $0x3f] sm:$0x1]
          %v236 = vperm.slane %v232, 0
          %v237 = vperm.slane %v233, 0
          %v238 = vperm.slane %v234, 0
          %v239 = vperm.slane %v235, 0
          %244 = vrot.lane.b32.xlu0 %v236, 4
          %v245 = vpop.permute.xlu0 %244
          %246 = vrot.lane.b32.xlu0 %v237, 4
          %v247 = vpop.permute.xlu0 %246
          %248 = vrot.lane.b32.xlu0 %v238, 4
          %v249 = vpop.permute.xlu0 %248
          %250 = vrot.lane.b32.xlu0 %v239, 4
          %v251 = vpop.permute.xlu0 %250
          %256 = vst.msk [vmem:[#allocation2 + $0x14] sm:$0xf] %vm227, %v245
          %257 = vst.msk [vmem:[#allocation2 + $0x2c] sm:$0xf] %vm227, %v247
          %258 = vst.msk [vmem:[#allocation2 + $0x44] sm:$0xf] %vm227, %v249
          %259 = vst.msk [vmem:[#allocation2 + $0x5c] sm:$0xf] %vm227, %v251
          %v260 = vld [vmem:[#allocation2] sm:$0xff]
          %v261 = vld [vmem:[#allocation2 + $0x8] sm:$0xff]
          %v262 = vld [vmem:[#allocation2 + $0x10] sm:$0xff]
          %v263 = vld [vmem:[#allocation2 + $0x18] sm:$0xff]
          %v264 = vld [vmem:[#allocation2 + $0x20] sm:$0xff]
          %v265 = vld [vmem:[#allocation2 + $0x28] sm:$0xff]
          %v266 = vld [vmem:[#allocation2 + $0x30] sm:$0xff]
          %v267 = vld [vmem:[#allocation2 + $0x38] sm:$0xff]
          %v268 = vld [vmem:[#allocation2 + $0x40] sm:$0xff]
          %v269 = vld [vmem:[#allocation2 + $0x48] sm:$0xff]
          %v270 = vld [vmem:[#allocation2 + $0x50] sm:$0xff]
          %v271 = vld [vmem:[#allocation2 + $0x58] sm:$0xff]
          %273 = vset.pattern.permute.xlu0 4
          %274 = vperm.xlu0 %273, %v260
          %v275 = vpop.permute.xlu0 %274
          %278 = vset.pattern.permute.xlu0 4
          %279 = vperm.xlu0 %278, %v261
          %v280 = vpop.permute.xlu0 %279
          %283 = vset.pattern.permute.xlu0 4
          %284 = vperm.xlu0 %283, %v262
          %v285 = vpop.permute.xlu0 %284
          %288 = vset.pattern.permute.xlu0 4
          %289 = vperm.xlu0 %288, %v263
          %v290 = vpop.permute.xlu0 %289
          %293 = vset.pattern.permute.xlu0 4
          %294 = vperm.xlu0 %293, %v264
          %v295 = vpop.permute.xlu0 %294
          %298 = vset.pattern.permute.xlu0 4
          %299 = vperm.xlu0 %298, %v265
          %v300 = vpop.permute.xlu0 %299
          %303 = vset.pattern.permute.xlu0 4
          %304 = vperm.xlu0 %303, %v266
          %v305 = vpop.permute.xlu0 %304
          %308 = vset.pattern.permute.xlu0 4
          %309 = vperm.xlu0 %308, %v267
          %v310 = vpop.permute.xlu0 %309
          %313 = vset.pattern.permute.xlu0 4
          %314 = vperm.xlu0 %313, %v268
          %v315 = vpop.permute.xlu0 %314
          %318 = vset.pattern.permute.xlu0 4
          %319 = vperm.xlu0 %318, %v269
          %v320 = vpop.permute.xlu0 %319
          %323 = vset.pattern.permute.xlu0 4
          %324 = vperm.xlu0 %323, %v270
          %v325 = vpop.permute.xlu0 %324
          %328 = vset.pattern.permute.xlu0 4
          %329 = vperm.xlu0 %328, %v271
          %v330 = vpop.permute.xlu0 %329
          %vm332 = vcmask 31744
          %333 = vst.msk [vmem:[#allocation2] sm:$0xff] %vm332, %v275
          %334 = vst.msk [vmem:[#allocation2 + $0x8] sm:$0xff] %vm332, %v280
          %335 = vst.msk [vmem:[#allocation2 + $0x10] sm:$0xff] %vm332, %v285
          %336 = vst.msk [vmem:[#allocation2 + $0x18] sm:$0xff] %vm332, %v290
          %337 = vst.msk [vmem:[#allocation2 + $0x20] sm:$0xff] %vm332, %v295
          %338 = vst.msk [vmem:[#allocation2 + $0x28] sm:$0xff] %vm332, %v300
          %339 = vst.msk [vmem:[#allocation2 + $0x30] sm:$0xff] %vm332, %v305
          %340 = vst.msk [vmem:[#allocation2 + $0x38] sm:$0xff] %vm332, %v310
          %341 = vst.msk [vmem:[#allocation2 + $0x40] sm:$0xff] %vm332, %v315
          %342 = vst.msk [vmem:[#allocation2 + $0x48] sm:$0xff] %vm332, %v320
          %343 = vst.msk [vmem:[#allocation2 + $0x50] sm:$0xff] %vm332, %v325
          %344 = vst.msk [vmem:[#allocation2 + $0x58] sm:$0xff] %vm332, %v330
          %v345 = vld [vmem:[#allocation2] sm:$0xff]
          %v346 = vld [vmem:[#allocation2 + $0x8] sm:$0xff]
          %v347 = vld [vmem:[#allocation2 + $0x10] sm:$0xff]
          %v348 = vld [vmem:[#allocation2 + $0x18] sm:$0xff]
          %v349 = vld [vmem:[#allocation2 + $0x20] sm:$0xff]
          %v350 = vld [vmem:[#allocation2 + $0x28] sm:$0xff]
          %v351 = vld [vmem:[#allocation2 + $0x30] sm:$0xff]
          %v352 = vld [vmem:[#allocation2 + $0x38] sm:$0xff]
          %v353 = vld [vmem:[#allocation2 + $0x40] sm:$0xff]
          %v354 = vld [vmem:[#allocation2 + $0x48] sm:$0xff]
          %v355 = vld [vmem:[#allocation2 + $0x50] sm:$0xff]
          %v356 = vld [vmem:[#allocation2 + $0x58] sm:$0xff]
          %358 = vset.pattern.permute.xlu0 19
          %359 = vperm.xlu0 %358, %v345
          %v360 = vpop.permute.xlu0 %359
          %363 = vset.pattern.permute.xlu0 19
          %364 = vperm.xlu0 %363, %v346
          %v365 = vpop.permute.xlu0 %364
          %368 = vset.pattern.permute.xlu0 19
          %369 = vperm.xlu0 %368, %v347
          %v370 = vpop.permute.xlu0 %369
          %373 = vset.pattern.permute.xlu0 19
          %374 = vperm.xlu0 %373, %v348
          %v375 = vpop.permute.xlu0 %374
          %378 = vset.pattern.permute.xlu0 19
          %379 = vperm.xlu0 %378, %v349
          %v380 = vpop.permute.xlu0 %379
          %383 = vset.pattern.permute.xlu0 19
          %384 = vperm.xlu0 %383, %v350
          %v385 = vpop.permute.xlu0 %384
          %388 = vset.pattern.permute.xlu0 19
          %389 = vperm.xlu0 %388, %v351
          %v390 = vpop.permute.xlu0 %389
          %393 = vset.pattern.permute.xlu0 19
          %394 = vperm.xlu0 %393, %v352
          %v395 = vpop.permute.xlu0 %394
          %398 = vset.pattern.permute.xlu0 19
          %399 = vperm.xlu0 %398, %v353
          %v400 = vpop.permute.xlu0 %399
          %403 = vset.pattern.permute.xlu0 19
          %404 = vperm.xlu0 %403, %v354
          %v405 = vpop.permute.xlu0 %404
          %408 = vset.pattern.permute.xlu0 19
          %409 = vperm.xlu0 %408, %v355
          %v410 = vpop.permute.xlu0 %409
          %413 = vset.pattern.permute.xlu0 19
          %414 = vperm.xlu0 %413, %v356
          %v415 = vpop.permute.xlu0 %414
          %vm417 = vcmask 195744
          %418 = vst.msk [vmem:[#allocation2] sm:$0xff] %vm417, %v360
          %419 = vst.msk [vmem:[#allocation2 + $0x8] sm:$0xff] %vm417, %v365
          %420 = vst.msk [vmem:[#allocation2 + $0x10] sm:$0xff] %vm417, %v370
          %421 = vst.msk [vmem:[#allocation2 + $0x18] sm:$0xff] %vm417, %v375
          %422 = vst.msk [vmem:[#allocation2 + $0x20] sm:$0xff] %vm417, %v380
          %423 = vst.msk [vmem:[#allocation2 + $0x28] sm:$0xff] %vm417, %v385
          %424 = vst.msk [vmem:[#allocation2 + $0x30] sm:$0xff] %vm417, %v390
          %425 = vst.msk [vmem:[#allocation2 + $0x38] sm:$0xff] %vm417, %v395
          %426 = vst.msk [vmem:[#allocation2 + $0x40] sm:$0xff] %vm417, %v400
          %427 = vst.msk [vmem:[#allocation2 + $0x48] sm:$0xff] %vm417, %v405
          %428 = vst.msk [vmem:[#allocation2 + $0x50] sm:$0xff] %vm417, %v410
          %429 = vst.msk [vmem:[#allocation2 + $0x58] sm:$0xff] %vm417, %v415
          %p430 = scmp.eq.s32.totalorder %s151, 0
          // Predicated region
          $region33: #{random_shifts_aug.1} parent=31 // pred_check
            %p431 = pneg %p430
          $region34: #{random_shifts_aug.1} parent=31 // pred_check_branch
            %433 = sbr.rel (%p431) target = $region36
          $region35: #{random_shifts_aug.1} parent=31 // pred_region
            %s434 = scalar_lea.vmem [#allocation2], %s153
            %v435 = vld [vmem:[%s434] sm:$0xff]
            %v436 = vld [vmem:[%s434 + $0x8] sm:$0xff]
            %v437 = vld [vmem:[%s434 + $0x18] sm:$0xff]
            %v438 = vld [vmem:[%s434 + $0x20] sm:$0xff]
            %v439 = vld [vmem:[%s434 + $0x30] sm:$0xff]
            %v440 = vld [vmem:[%s434 + $0x38] sm:$0xff]
            %v441 = vld [vmem:[%s434 + $0x48] sm:$0xff]
            %v442 = vld [vmem:[%s434 + $0x50] sm:$0xff]
            %vm443 = vcmask 130048
            %444 = vst.msk [vmem:[%s145] sm:$0xff] %vm443, %v435
            %445 = vst.msk [vmem:[%s145 + $0x8] sm:$0xff] %vm443, %v436
            %446 = vst.msk [vmem:[%s145 + $0x10] sm:$0xff] %vm443, %v437
            %447 = vst.msk [vmem:[%s145 + $0x18] sm:$0xff] %vm443, %v438
            %448 = vst.msk [vmem:[%s145 + $0x20] sm:$0xff] %vm443, %v439
            %449 = vst.msk [vmem:[%s145 + $0x28] sm:$0xff] %vm443, %v440
            %450 = vst.msk [vmem:[%s145 + $0x30] sm:$0xff] %vm443, %v441
            %451 = vst.msk [vmem:[%s145 + $0x38] sm:$0xff] %vm443, %v442
          $region36: #{random_shifts_aug.1} parent=31 // pred_fallthru
            _
          %p452 = scmp.eq.s32.totalorder %s151, 1
          // Predicated region
          $region37: #{random_shifts_aug.1} parent=31 // pred_check
            %p453 = pneg %p452
          $region38: #{random_shifts_aug.1} parent=31 // pred_check_branch
            %455 = sbr.rel (%p453) target = $region40
          $region39: #{random_shifts_aug.1} parent=31 // pred_region
            %s456 = scalar_lea.vmem [#allocation2], %s153
            %v457 = vld [vmem:[%s456] sm:$0xff]
            %v458 = vld [vmem:[%s456 + $0x8] sm:$0xff]
            %v459 = vld [vmem:[%s456 + $0x18] sm:$0xff]
            %v460 = vld [vmem:[%s456 + $0x20] sm:$0xff]
            %v461 = vld [vmem:[%s456 + $0x30] sm:$0xff]
            %v462 = vld [vmem:[%s456 + $0x38] sm:$0xff]
            %v463 = vld [vmem:[%s456 + $0x48] sm:$0xff]
            %v464 = vld [vmem:[%s456 + $0x50] sm:$0xff]
            %473 = vrot.lane.b32.xlu0 %v457, 127
            %v474 = vpop.permute.xlu0 %473
            %475 = vrot.lane.b32.xlu0 %v458, 127
            %v476 = vpop.permute.xlu0 %475
            %477 = vrot.lane.b32.xlu0 %v459, 127
            %v478 = vpop.permute.xlu0 %477
            %479 = vrot.lane.b32.xlu0 %v460, 127
            %v480 = vpop.permute.xlu0 %479
            %481 = vrot.lane.b32.xlu0 %v461, 127
            %v482 = vpop.permute.xlu0 %481
            %483 = vrot.lane.b32.xlu0 %v462, 127
            %v484 = vpop.permute.xlu0 %483
            %485 = vrot.lane.b32.xlu0 %v463, 127
            %v486 = vpop.permute.xlu0 %485
            %487 = vrot.lane.b32.xlu0 %v464, 127
            %v488 = vpop.permute.xlu0 %487
            %vm497 = vcmask 130048
            %498 = vst.msk [vmem:[%s145] sm:$0xff] %vm497, %v474
            %499 = vst.msk [vmem:[%s145 + $0x8] sm:$0xff] %vm497, %v476
            %500 = vst.msk [vmem:[%s145 + $0x10] sm:$0xff] %vm497, %v478
            %501 = vst.msk [vmem:[%s145 + $0x18] sm:$0xff] %vm497, %v480
            %502 = vst.msk [vmem:[%s145 + $0x20] sm:$0xff] %vm497, %v482
            %503 = vst.msk [vmem:[%s145 + $0x28] sm:$0xff] %vm497, %v484
            %504 = vst.msk [vmem:[%s145 + $0x30] sm:$0xff] %vm497, %v486
            %505 = vst.msk [vmem:[%s145 + $0x38] sm:$0xff] %vm497, %v488
          $region40: #{random_shifts_aug.1} parent=31 // pred_fallthru
            _
          %p506 = scmp.eq.s32.totalorder %s151, 2
          // Predicated region
          $region41: #{random_shifts_aug.1} parent=31 // pred_check
            %p507 = pneg %p506
          $region42: #{random_shifts_aug.1} parent=31 // pred_check_branch
            %509 = sbr.rel (%p507) target = $region44
          $region43: #{random_shifts_aug.1} parent=31 // pred_region
            %s510 = scalar_lea.vmem [#allocation2], %s153
            %v511 = vld [vmem:[%s510] sm:$0xff]
            %v512 = vld [vmem:[%s510 + $0x8] sm:$0xff]
            %v513 = vld [vmem:[%s510 + $0x18] sm:$0xff]
            %v514 = vld [vmem:[%s510 + $0x20] sm:$0xff]
            %v515 = vld [vmem:[%s510 + $0x30] sm:$0xff]
            %v516 = vld [vmem:[%s510 + $0x38] sm:$0xff]
            %v517 = vld [vmem:[%s510 + $0x48] sm:$0xff]
            %v518 = vld [vmem:[%s510 + $0x50] sm:$0xff]
            %527 = vrot.lane.b32.xlu0 %v511, 126
            %v528 = vpop.permute.xlu0 %527
            %529 = vrot.lane.b32.xlu0 %v512, 126
            %v530 = vpop.permute.xlu0 %529
            %531 = vrot.lane.b32.xlu0 %v513, 126
            %v532 = vpop.permute.xlu0 %531
            %533 = vrot.lane.b32.xlu0 %v514, 126
            %v534 = vpop.permute.xlu0 %533
            %535 = vrot.lane.b32.xlu0 %v515, 126
            %v536 = vpop.permute.xlu0 %535
            %537 = vrot.lane.b32.xlu0 %v516, 126
            %v538 = vpop.permute.xlu0 %537
            %539 = vrot.lane.b32.xlu0 %v517, 126
            %v540 = vpop.permute.xlu0 %539
            %541 = vrot.lane.b32.xlu0 %v518, 126
            %v542 = vpop.permute.xlu0 %541
            %vm551 = vcmask 130048
            %552 = vst.msk [vmem:[%s145] sm:$0xff] %vm551, %v528
            %553 = vst.msk [vmem:[%s145 + $0x8] sm:$0xff] %vm551, %v530
            %554 = vst.msk [vmem:[%s145 + $0x10] sm:$0xff] %vm551, %v532
            %555 = vst.msk [vmem:[%s145 + $0x18] sm:$0xff] %vm551, %v534
            %556 = vst.msk [vmem:[%s145 + $0x20] sm:$0xff] %vm551, %v536
            %557 = vst.msk [vmem:[%s145 + $0x28] sm:$0xff] %vm551, %v538
            %558 = vst.msk [vmem:[%s145 + $0x30] sm:$0xff] %vm551, %v540
            %559 = vst.msk [vmem:[%s145 + $0x38] sm:$0xff] %vm551, %v542
          $region44: #{random_shifts_aug.1} parent=31 // pred_fallthru
            _
          %p560 = scmp.eq.s32.totalorder %s151, 3
          // Predicated region
          $region45: #{random_shifts_aug.1} parent=31 // pred_check
            %p561 = pneg %p560
          $region46: #{random_shifts_aug.1} parent=31 // pred_check_branch
            %563 = sbr.rel (%p561) target = $region48
          $region47: #{random_shifts_aug.1} parent=31 // pred_region
            %s564 = scalar_lea.vmem [#allocation2], %s153
            %v565 = vld [vmem:[%s564] sm:$0xff]
            %v566 = vld [vmem:[%s564 + $0x8] sm:$0xff]
            %v567 = vld [vmem:[%s564 + $0x18] sm:$0xff]
            %v568 = vld [vmem:[%s564 + $0x20] sm:$0xff]
            %v569 = vld [vmem:[%s564 + $0x30] sm:$0xff]
            %v570 = vld [vmem:[%s564 + $0x38] sm:$0xff]
            %v571 = vld [vmem:[%s564 + $0x48] sm:$0xff]
            %v572 = vld [vmem:[%s564 + $0x50] sm:$0xff]
            %581 = vrot.lane.b32.xlu0 %v565, 125
            %v582 = vpop.permute.xlu0 %581
            %583 = vrot.lane.b32.xlu0 %v566, 125
            %v584 = vpop.permute.xlu0 %583
            %585 = vrot.lane.b32.xlu0 %v567, 125
            %v586 = vpop.permute.xlu0 %585
            %587 = vrot.lane.b32.xlu0 %v568, 125
            %v588 = vpop.permute.xlu0 %587
            %589 = vrot.lane.b32.xlu0 %v569, 125
            %v590 = vpop.permute.xlu0 %589
            %591 = vrot.lane.b32.xlu0 %v570, 125
            %v592 = vpop.permute.xlu0 %591
            %593 = vrot.lane.b32.xlu0 %v571, 125
            %v594 = vpop.permute.xlu0 %593
            %595 = vrot.lane.b32.xlu0 %v572, 125
            %v596 = vpop.permute.xlu0 %595
            %vm605 = vcmask 130048
            %606 = vst.msk [vmem:[%s145] sm:$0xff] %vm605, %v582
            %607 = vst.msk [vmem:[%s145 + $0x8] sm:$0xff] %vm605, %v584
            %608 = vst.msk [vmem:[%s145 + $0x10] sm:$0xff] %vm605, %v586
            %609 = vst.msk [vmem:[%s145 + $0x18] sm:$0xff] %vm605, %v588
            %610 = vst.msk [vmem:[%s145 + $0x20] sm:$0xff] %vm605, %v590
            %611 = vst.msk [vmem:[%s145 + $0x28] sm:$0xff] %vm605, %v592
            %612 = vst.msk [vmem:[%s145 + $0x30] sm:$0xff] %vm605, %v594
            %613 = vst.msk [vmem:[%s145 + $0x38] sm:$0xff] %vm605, %v596
          $region48: #{random_shifts_aug.1} parent=31 // pred_fallthru
            _
          %p614 = scmp.eq.s32.totalorder %s151, 4
          // Predicated region
          $region49: #{random_shifts_aug.1} parent=31 // pred_check
            %p615 = pneg %p614
          $region50: #{random_shifts_aug.1} parent=31 // pred_check_branch
            %617 = sbr.rel (%p615) target = $region52
          $region51: #{random_shifts_aug.1} parent=31 // pred_region
            %s618 = scalar_lea.vmem [#allocation2], %s153
            %v619 = vld [vmem:[%s618] sm:$0xff]
            %v620 = vld [vmem:[%s618 + $0x8] sm:$0xff]
            %v621 = vld [vmem:[%s618 + $0x18] sm:$0xff]
            %v622 = vld [vmem:[%s618 + $0x20] sm:$0xff]
            %v623 = vld [vmem:[%s618 + $0x30] sm:$0xff]
            %v624 = vld [vmem:[%s618 + $0x38] sm:$0xff]
            %v625 = vld [vmem:[%s618 + $0x48] sm:$0xff]
            %v626 = vld [vmem:[%s618 + $0x50] sm:$0xff]
            %635 = vrot.lane.b32.xlu0 %v619, 124
            %v636 = vpop.permute.xlu0 %635
            %637 = vrot.lane.b32.xlu0 %v620, 124
            %v638 = vpop.permute.xlu0 %637
            %639 = vrot.lane.b32.xlu0 %v621, 124
            %v640 = vpop.permute.xlu0 %639
            %641 = vrot.lane.b32.xlu0 %v622, 124
            %v642 = vpop.permute.xlu0 %641
            %643 = vrot.lane.b32.xlu0 %v623, 124
            %v644 = vpop.permute.xlu0 %643
            %645 = vrot.lane.b32.xlu0 %v624, 124
            %v646 = vpop.permute.xlu0 %645
            %647 = vrot.lane.b32.xlu0 %v625, 124
            %v648 = vpop.permute.xlu0 %647
            %649 = vrot.lane.b32.xlu0 %v626, 124
            %v650 = vpop.permute.xlu0 %649
            %vm659 = vcmask 130048
            %660 = vst.msk [vmem:[%s145] sm:$0xff] %vm659, %v636
            %661 = vst.msk [vmem:[%s145 + $0x8] sm:$0xff] %vm659, %v638
            %662 = vst.msk [vmem:[%s145 + $0x10] sm:$0xff] %vm659, %v640
            %663 = vst.msk [vmem:[%s145 + $0x18] sm:$0xff] %vm659, %v642
            %664 = vst.msk [vmem:[%s145 + $0x20] sm:$0xff] %vm659, %v644
            %665 = vst.msk [vmem:[%s145 + $0x28] sm:$0xff] %vm659, %v646
            %666 = vst.msk [vmem:[%s145 + $0x30] sm:$0xff] %vm659, %v648
            %667 = vst.msk [vmem:[%s145 + $0x38] sm:$0xff] %vm659, %v650
          $region52: #{random_shifts_aug.1} parent=31 // pred_fallthru
            _
          %p668 = scmp.eq.s32.totalorder %s151, 5
          // Predicated region
          $region53: #{random_shifts_aug.1} parent=31 // pred_check
            %p669 = pneg %p668
          $region54: #{random_shifts_aug.1} parent=31 // pred_check_branch
            %671 = sbr.rel (%p669) target = $region56
          $region55: #{random_shifts_aug.1} parent=31 // pred_region
            %s672 = scalar_lea.vmem [#allocation2], %s153
            %v673 = vld [vmem:[%s672] sm:$0xff]
            %v674 = vld [vmem:[%s672 + $0x8] sm:$0xff]
            %v675 = vld [vmem:[%s672 + $0x18] sm:$0xff]
            %v676 = vld [vmem:[%s672 + $0x20] sm:$0xff]
            %v677 = vld [vmem:[%s672 + $0x30] sm:$0xff]
            %v678 = vld [vmem:[%s672 + $0x38] sm:$0xff]
            %v679 = vld [vmem:[%s672 + $0x48] sm:$0xff]
            %v680 = vld [vmem:[%s672 + $0x50] sm:$0xff]
            %689 = vrot.lane.b32.xlu0 %v673, 123
            %v690 = vpop.permute.xlu0 %689
            %691 = vrot.lane.b32.xlu0 %v674, 123
            %v692 = vpop.permute.xlu0 %691
            %693 = vrot.lane.b32.xlu0 %v675, 123
            %v694 = vpop.permute.xlu0 %693
            %695 = vrot.lane.b32.xlu0 %v676, 123
            %v696 = vpop.permute.xlu0 %695
            %697 = vrot.lane.b32.xlu0 %v677, 123
            %v698 = vpop.permute.xlu0 %697
            %699 = vrot.lane.b32.xlu0 %v678, 123
            %v700 = vpop.permute.xlu0 %699
            %701 = vrot.lane.b32.xlu0 %v679, 123
            %v702 = vpop.permute.xlu0 %701
            %703 = vrot.lane.b32.xlu0 %v680, 123
            %v704 = vpop.permute.xlu0 %703
            %vm713 = vcmask 130048
            %714 = vst.msk [vmem:[%s145] sm:$0xff] %vm713, %v690
            %715 = vst.msk [vmem:[%s145 + $0x8] sm:$0xff] %vm713, %v692
            %716 = vst.msk [vmem:[%s145 + $0x10] sm:$0xff] %vm713, %v694
            %717 = vst.msk [vmem:[%s145 + $0x18] sm:$0xff] %vm713, %v696
            %718 = vst.msk [vmem:[%s145 + $0x20] sm:$0xff] %vm713, %v698
            %719 = vst.msk [vmem:[%s145 + $0x28] sm:$0xff] %vm713, %v700
            %720 = vst.msk [vmem:[%s145 + $0x30] sm:$0xff] %vm713, %v702
            %721 = vst.msk [vmem:[%s145 + $0x38] sm:$0xff] %vm713, %v704
          $region56: #{random_shifts_aug.1} parent=31 // pred_fallthru
            _
          %p722 = scmp.eq.s32.totalorder %s151, 6
          // Predicated region
          $region57: #{random_shifts_aug.1} parent=31 // pred_check
            %p723 = pneg %p722
          $region58: #{random_shifts_aug.1} parent=31 // pred_check_branch
            %725 = sbr.rel (%p723) target = $region60
          $region59: #{random_shifts_aug.1} parent=31 // pred_region
            %s726 = scalar_lea.vmem [#allocation2], %s153
            %v727 = vld [vmem:[%s726] sm:$0xff]
            %v728 = vld [vmem:[%s726 + $0x8] sm:$0xff]
            %v729 = vld [vmem:[%s726 + $0x18] sm:$0xff]
            %v730 = vld [vmem:[%s726 + $0x20] sm:$0xff]
            %v731 = vld [vmem:[%s726 + $0x30] sm:$0xff]
            %v732 = vld [vmem:[%s726 + $0x38] sm:$0xff]
            %v733 = vld [vmem:[%s726 + $0x48] sm:$0xff]
            %v734 = vld [vmem:[%s726 + $0x50] sm:$0xff]
            %743 = vrot.lane.b32.xlu0 %v727, 122
            %v744 = vpop.permute.xlu0 %743
            %745 = vrot.lane.b32.xlu0 %v728, 122
            %v746 = vpop.permute.xlu0 %745
            %747 = vrot.lane.b32.xlu0 %v729, 122
            %v748 = vpop.permute.xlu0 %747
            %749 = vrot.lane.b32.xlu0 %v730, 122
            %v750 = vpop.permute.xlu0 %749
            %751 = vrot.lane.b32.xlu0 %v731, 122
            %v752 = vpop.permute.xlu0 %751
            %753 = vrot.lane.b32.xlu0 %v732, 122
            %v754 = vpop.permute.xlu0 %753
            %755 = vrot.lane.b32.xlu0 %v733, 122
            %v756 = vpop.permute.xlu0 %755
            %757 = vrot.lane.b32.xlu0 %v734, 122
            %v758 = vpop.permute.xlu0 %757
            %vm767 = vcmask 130048
            %768 = vst.msk [vmem:[%s145] sm:$0xff] %vm767, %v744
            %769 = vst.msk [vmem:[%s145 + $0x8] sm:$0xff] %vm767, %v746
            %770 = vst.msk [vmem:[%s145 + $0x10] sm:$0xff] %vm767, %v748
            %771 = vst.msk [vmem:[%s145 + $0x18] sm:$0xff] %vm767, %v750
            %772 = vst.msk [vmem:[%s145 + $0x20] sm:$0xff] %vm767, %v752
            %773 = vst.msk [vmem:[%s145 + $0x28] sm:$0xff] %vm767, %v754
            %774 = vst.msk [vmem:[%s145 + $0x30] sm:$0xff] %vm767, %v756
            %775 = vst.msk [vmem:[%s145 + $0x38] sm:$0xff] %vm767, %v758
          $region60: #{random_shifts_aug.1} parent=31 // pred_fallthru
            _
          %p776 = scmp.eq.s32.totalorder %s151, 7
          // Predicated region
          $region61: #{random_shifts_aug.1} parent=31 // pred_check
            %p777 = pneg %p776
          $region62: #{random_shifts_aug.1} parent=31 // pred_check_branch
            %779 = sbr.rel (%p777) target = $region64
          $region63: #{random_shifts_aug.1} parent=31 // pred_region
            %s780 = scalar_lea.vmem [#allocation2], %s153
            %v781 = vld [vmem:[%s780] sm:$0xff]
            %v782 = vld [vmem:[%s780 + $0x8] sm:$0xff]
            %v783 = vld [vmem:[%s780 + $0x18] sm:$0xff]
            %v784 = vld [vmem:[%s780 + $0x20] sm:$0xff]
            %v785 = vld [vmem:[%s780 + $0x30] sm:$0xff]
            %v786 = vld [vmem:[%s780 + $0x38] sm:$0xff]
            %v787 = vld [vmem:[%s780 + $0x48] sm:$0xff]
            %v788 = vld [vmem:[%s780 + $0x50] sm:$0xff]
            %797 = vrot.lane.b32.xlu0 %v781, 121
            %v798 = vpop.permute.xlu0 %797
            %799 = vrot.lane.b32.xlu0 %v782, 121
            %v800 = vpop.permute.xlu0 %799
            %801 = vrot.lane.b32.xlu0 %v783, 121
            %v802 = vpop.permute.xlu0 %801
            %803 = vrot.lane.b32.xlu0 %v784, 121
            %v804 = vpop.permute.xlu0 %803
            %805 = vrot.lane.b32.xlu0 %v785, 121
            %v806 = vpop.permute.xlu0 %805
            %807 = vrot.lane.b32.xlu0 %v786, 121
            %v808 = vpop.permute.xlu0 %807
            %809 = vrot.lane.b32.xlu0 %v787, 121
            %v810 = vpop.permute.xlu0 %809
            %811 = vrot.lane.b32.xlu0 %v788, 121
            %v812 = vpop.permute.xlu0 %811
            %vm821 = vcmask 130048
            %822 = vst.msk [vmem:[%s145] sm:$0xff] %vm821, %v798
            %823 = vst.msk [vmem:[%s145 + $0x8] sm:$0xff] %vm821, %v800
            %824 = vst.msk [vmem:[%s145 + $0x10] sm:$0xff] %vm821, %v802
            %825 = vst.msk [vmem:[%s145 + $0x18] sm:$0xff] %vm821, %v804
            %826 = vst.msk [vmem:[%s145 + $0x20] sm:$0xff] %vm821, %v806
            %827 = vst.msk [vmem:[%s145 + $0x28] sm:$0xff] %vm821, %v808
            %828 = vst.msk [vmem:[%s145 + $0x30] sm:$0xff] %vm821, %v810
            %829 = vst.msk [vmem:[%s145 + $0x38] sm:$0xff] %vm821, %v812
          $region64: #{random_shifts_aug.1} parent=31 // pred_fallthru
            _
          %p830 = scmp.eq.s32.totalorder %s151, 8
          // Predicated region
          $region65: #{random_shifts_aug.1} parent=31 // pred_check
            %p831 = pneg %p830
          $region66: #{random_shifts_aug.1} parent=31 // pred_check_branch
            %833 = sbr.rel (%p831) target = $region68
          $region67: #{random_shifts_aug.1} parent=31 // pred_region
            %s834 = scalar_lea.vmem [#allocation2], %s153
            %v835 = vld [vmem:[%s834] sm:$0xff]
            %v836 = vld [vmem:[%s834 + $0x8] sm:$0xff]
            %v837 = vld [vmem:[%s834 + $0x18] sm:$0xff]
            %v838 = vld [vmem:[%s834 + $0x20] sm:$0xff]
            %v839 = vld [vmem:[%s834 + $0x30] sm:$0xff]
            %v840 = vld [vmem:[%s834 + $0x38] sm:$0xff]
            %v841 = vld [vmem:[%s834 + $0x48] sm:$0xff]
            %v842 = vld [vmem:[%s834 + $0x50] sm:$0xff]
            %851 = vrot.lane.b32.xlu0 %v835, 120
            %v852 = vpop.permute.xlu0 %851
            %853 = vrot.lane.b32.xlu0 %v836, 120
            %v854 = vpop.permute.xlu0 %853
            %855 = vrot.lane.b32.xlu0 %v837, 120
            %v856 = vpop.permute.xlu0 %855
            %857 = vrot.lane.b32.xlu0 %v838, 120
            %v858 = vpop.permute.xlu0 %857
            %859 = vrot.lane.b32.xlu0 %v839, 120
            %v860 = vpop.permute.xlu0 %859
            %861 = vrot.lane.b32.xlu0 %v840, 120
            %v862 = vpop.permute.xlu0 %861
            %863 = vrot.lane.b32.xlu0 %v841, 120
            %v864 = vpop.permute.xlu0 %863
            %865 = vrot.lane.b32.xlu0 %v842, 120
            %v866 = vpop.permute.xlu0 %865
            %vm875 = vcmask 130048
            %876 = vst.msk [vmem:[%s145] sm:$0xff] %vm875, %v852
            %877 = vst.msk [vmem:[%s145 + $0x8] sm:$0xff] %vm875, %v854
            %878 = vst.msk [vmem:[%s145 + $0x10] sm:$0xff] %vm875, %v856
            %879 = vst.msk [vmem:[%s145 + $0x18] sm:$0xff] %vm875, %v858
            %880 = vst.msk [vmem:[%s145 + $0x20] sm:$0xff] %vm875, %v860
            %881 = vst.msk [vmem:[%s145 + $0x28] sm:$0xff] %vm875, %v862
            %882 = vst.msk [vmem:[%s145 + $0x30] sm:$0xff] %vm875, %v864
            %883 = vst.msk [vmem:[%s145 + $0x38] sm:$0xff] %vm875, %v866
          $region68: #{random_shifts_aug.1} parent=31 // pred_fallthru
            _
        $region32: #{random_shifts_aug.1} parent=23 // pred_fallthru
          _
        %s884 = sand.u32 %s61, 1
        %s885 = scalar_lea.sflag [#allocation7], %s884
        %s886 = sand.u32 %s61, 1
        %s887 = smul.addr %s886, 64
        %s888 = scalar_lea.vmem [#allocation8], %s887
        // Predicated region
        $region69: #{random_shifts_aug.1} parent=23 // pred_check
          %p889 = pneg %p71
        $region70: #{random_shifts_aug.1} parent=23 // pred_check_branch
          %891 = sbr.rel (%p889) target = $region72
        $region71: #{random_shifts_aug.1} parent=23 // pred_region
          %893 = vsyncadd %s885, 0
          %s894 = smul.addr %s27, 8
          %s895 = smul.addr %s894, 8
          %s896 = scalar_lea.hbm %s2, %s895
          %s897 = sshll.u32 %s888, 4
          %s898 = int_to_ptr.vmem [resolvable:$true] %s897
          %s899 = sshll.u32 %s896, 4
          %s900 = int_to_ptr.hbm [resolvable:$true] %s899
          %905 = dma.vmem_to_hbm [thread:$0]  %s898, 1024, %s900, %s885, 128, 128, 8
        $region72: #{random_shifts_aug.1} parent=23 // pred_fallthru
          _
      $region24: #{random_shifts_aug.1} parent=5 // pred_fallthru
        _
      %p906 = scmp.le.s32.totalorder 2, %s22
      // Predicated region
      $region73: #{random_shifts_aug.1} parent=5 // pred_check
        %p907 = pneg %p906
      $region74: #{random_shifts_aug.1} parent=5 // pred_check_branch
        %909 = sbr.rel (%p907) target = $region76
      $region75: #{random_shifts_aug.1} parent=5 // pred_region
        %s910 = ssub.s32 %s22, 2
        // Predicated region
        $region77: #{random_shifts_aug.1} parent=75 // pred_check
          %p911 = pneg %p77
        $region78: #{random_shifts_aug.1} parent=75 // pred_check_branch
          %913 = sbr.rel (%p911) target = $region80
        $region79: #{random_shifts_aug.1} parent=75 // pred_region
          %s914 = sand.u32 %s62, 1
          %s915 = scalar_lea.sflag [#allocation7], %s914
          %s916 = sand.u32 %s62, 1
          %s917 = smul.addr %s916, 64
          %s918 = scalar_lea.vmem [#allocation8], %s917
          %920 = dma.done %s915, 1024
        $region80: #{random_shifts_aug.1} parent=75 // pred_fallthru
          _
      $region76: #{random_shifts_aug.1} parent=5 // pred_fallthru
        _
    $region6: #{random_shifts_aug.1} parent=1 // loop_footer
      %s26 = sadd.s32 1, %s22
    $region7: #{random_shifts_aug.1} parent=1 // loop_footer_branch
      %21 = sbr.rel target = $region3
    $region8: #{random_shifts_aug.1} parent=1 // loop_exit
      _
    %921 = vsyncpa [#allocation6], 1
    %s922 = scalar_lea.sflag [#allocation6], 1
    %923 = vsyncpa %s922, 1
    %924 = vsyncpa [#allocation7], 1
    %s925 = scalar_lea.sflag [#allocation7], 1
    %926 = vsyncpa %s925, 1

</llo_original>
